<compile_context>
chip_gen: v7x
topology: tpu7x:2x2x1
jax: 0.10.0
libtpu: 0.0.40
codegen_flags: <defaults>
</compile_context>

<pallas_src>
import math

import jax
import jax.numpy as jnp
from jax.experimental import pallas as pl
from jax.experimental.pallas import tpu as pltpu


# ---------------------------------------------------------------------------
# Kernels
# ---------------------------------------------------------------------------

def _packed_kernel(x_ref, w_ref, b_ref, o_ref):
    """Tiny-OUT path: all ensemble members in one step, one lane-dense slab."""
    n_members = x_ref.shape[0]
    parts = []
    for e in range(n_members):  # static unroll; E is small on this path
        y = jnp.dot(x_ref[e], w_ref[e], preferred_element_type=jnp.float32)
        y = y + b_ref[e].astype(jnp.float32)       # (1, OUT) broadcasts over B
        parts.append(y)
    slab = parts[0] if n_members == 1 else jnp.concatenate(parts, axis=-1)
    o_ref[...] = slab.astype(o_ref.dtype)          # single dense (B, E*OUT) store


def _tiled_kernel_f32(x_ref, w_ref, b_ref, o_ref):
    """General path, f32 output: accumulate directly into the resident output
    block (no scratch); bias is folded into the k==0 init."""
    k = pl.program_id(3)

    @pl.when(k == 0)
    def _():
        o_ref[...] = jnp.broadcast_to(b_ref[...], o_ref.shape).astype(o_ref.dtype)

    o_ref[...] += jnp.einsum(
        "ebi,eio->ebo", x_ref[...], w_ref[...],
        preferred_element_type=jnp.float32,
    )


def _tiled_kernel_acc(x_ref, w_ref, b_ref, o_ref, acc_ref):
    """General path, low-precision output: f32 VMEM scratch accumulator."""
    k = pl.program_id(3)

    @pl.when(k == 0)
    def _():
        acc_ref[...] = jnp.broadcast_to(b_ref[...], acc_ref.shape).astype(jnp.float32)

    acc_ref[...] += jnp.einsum(
        "ebi,eio->ebo", x_ref[...], w_ref[...],
        preferred_element_type=jnp.float32,
    )

    @pl.when(k == pl.num_programs(3) - 1)
    def _():
        o_ref[...] = acc_ref[...].astype(o_ref.dtype)


# ---------------------------------------------------------------------------
# Tile selection helpers
# ---------------------------------------------------------------------------

_W_TILE_BUDGET = 8 << 20    # per-step weight tile target (dominant HBM stream)
_XO_TILE_BUDGET = 4 << 20   # per-step x tile / out+acc tile targets (each)


def _pick_tile(dim: int, cap_elems: int, align: int) -> int:
    """Largest `align`-multiple divisor of `dim` that is <= cap_elems.
    Returns the full extent when dim already fits or no aligned divisor exists
    (full extent is always a legal BlockSpec)."""
    if dim <= cap_elems:
        return dim
    t = (min(cap_elems, dim) // align) * align
    while t >= align:
        if dim % t == 0:
            return t
        t -= align
    return dim


def _largest_divisor_leq(n: int, cap: int) -> int:
    cap = max(1, min(n, cap))
    for d in range(cap, 0, -1):
        if n % d == 0:
            return d
    return 1


def _vmem_capacity_bytes() -> int:
    try:
        return int(pltpu.get_tpu_info().vmem_capacity_bytes)
    except Exception:
        return 64 << 20  # conservative: v7x per-TensorCore VMEM


# ---------------------------------------------------------------------------
# Wrapper
# ---------------------------------------------------------------------------

def ensembled_linear(x, weight, bias):
    """x: [E, B, IN], weight: [E, IN, OUT], bias: [E, 1, OUT] -> [E, B, OUT].

    Accepts whatever dtypes the caller stores (e.g. persistent bf16 weights);
    accumulation is always f32 inside the kernel. Output dtype follows x."""
    E, B, IN = x.shape
    _, _, OUT = weight.shape
    assert weight.shape == (E, IN, OUT)
    assert bias.shape == (E, 1, OUT)

    out_dtype = x.dtype
    x_item = jnp.dtype(x.dtype).itemsize
    w_item = jnp.dtype(weight.dtype).itemsize
    b_item = jnp.dtype(bias.dtype).itemsize
    o_item = jnp.dtype(out_dtype).itemsize
    acc_item = max(o_item, 4)  # out/acc is f32-resident on the general path

    # ---- tiny-OUT lane-packed path ---------------------------------------
    packed_bytes = (x.size * x_item + weight.size * w_item + bias.size * b_item
                    + B * E * OUT * 4)
    if OUT < 128 and E <= 32 and E * OUT <= 4096 and packed_bytes <= (4 << 20):
        slab = pl.pallas_call(
            _packed_kernel,
            out_shape=jax.ShapeDtypeStruct((B, E * OUT), out_dtype),
            grid=(1,),
            in_specs=[
                pl.BlockSpec((E, B, IN), lambda i: (0, 0, 0)),
                pl.BlockSpec((E, IN, OUT), lambda i: (0, 0, 0)),
                pl.BlockSpec((E, 1, OUT), lambda i: (0, 0, 0)),
            ],
            out_specs=pl.BlockSpec((B, E * OUT), lambda i: (0, 0)),
        )(x, weight, bias)
        # slab[b, e*OUT + o] == out[e, b, o]
        return jnp.transpose(slab.reshape(B, E, OUT), (1, 0, 2))

    # ---- general tiled path -----------------------------------------------
    # batch tile: multiple of 8 sublanes, capped so x / out tiles stay modest
    if B <= 256:
        b_tile = B
    else:
        b_tile = _pick_tile(B, 256, 8)

    min_in = IN if IN <= 128 else 128

    # Prefer full-OUT weight tiles (contiguous weight DMA, no x re-fetch,
    # lane-dense output); only split OUT when the budgets force it.
    if (min_in * OUT * w_item <= _W_TILE_BUDGET
            and b_tile * OUT * acc_item <= _XO_TILE_BUDGET):
        out_tile = OUT
    else:
        cap_elems = max(128, min(_W_TILE_BUDGET // max(1, min_in * w_item),
                                 _XO_TILE_BUDGET // max(1, b_tile * acc_item)))
        out_tile = _pick_tile(OUT, cap_elems, 128)

    # Tile the reduction (IN) axis to stay inside the weight-tile budget.
    in_cap = max(min_in, min(_W_TILE_BUDGET // max(1, out_tile * w_item),
                             _XO_TILE_BUDGET // max(1, b_tile * x_item)))
    in_tile = _pick_tile(IN, in_cap, 128)

    # Pack ensemble members per step while the per-member tiles are small.
    member_w = in_tile * out_tile * w_item
    member_x = b_tile * in_tile * x_item
    member_o = b_tile * out_tile * acc_item
    e_cap = max(1, min(_W_TILE_BUDGET // max(1, member_w),
                       _XO_TILE_BUDGET // max(1, member_x),
                       _XO_TILE_BUDGET // max(1, member_o)))

    weight_bytes_total = E * IN * OUT * w_item
    nontrivial = weight_bytes_total >= (2 << 20)
    if nontrivial and E >= 2:
        # keep >=2 steps on the parallel axes so v7x's two TensorCores both work
        e_cap = min(e_cap, max(1, E // 2))
    e_tile = _largest_divisor_leq(E, e_cap)

    # E == 1: expose >=2 parallel steps by splitting OUT (or B) when non-trivial.
    par_steps = (E // e_tile) * (B // b_tile) * (OUT // out_tile)
    if nontrivial and par_steps < 2:
        if out_tile == OUT and out_tile % 256 == 0:
            out_tile //= 2
        elif b_tile == B and b_tile % 16 == 0:
            b_tile //= 2

    grid = (E // e_tile, B // b_tile, OUT // out_tile, IN // in_tile)

    use_scratch = jnp.dtype(out_dtype) != jnp.dtype(jnp.float32)
    kernel = _tiled_kernel_acc if use_scratch else _tiled_kernel_f32
    scratch_shapes = ([pltpu.VMEM((e_tile, b_tile, out_tile), jnp.float32)]
                      if use_scratch else [])

    # ---- VMEM budget (double-buffered operands + optional f32 accumulator) --
    x_t = e_tile * b_tile * in_tile * x_item
    w_t = e_tile * in_tile * out_tile * w_item
    b_t = e_tile * 1 * out_tile * b_item
    o_t = e_tile * b_tile * out_tile * o_item
    acc_t = e_tile * b_tile * out_tile * 4 if use_scratch else 0
    vmem_estimate = 2 * (x_t + w_t + b_t + o_t) + acc_t

    vmem_cap = _vmem_capacity_bytes()
    vmem_limit = min(int(0.75 * vmem_cap), max(32 << 20, 2 * vmem_estimate))
    vmem_limit = int(max(vmem_limit, vmem_estimate + (2 << 20)))

    cost = pl.CostEstimate(
        flops=2 * E * B * IN * OUT,
        transcendentals=0,
        bytes_accessed=(x.size * x_item * (OUT // out_tile)      # x re-reads per OUT tile
                        + weight.size * w_item * (B // b_tile)   # weight re-reads per B tile
                        + bias.size * b_item
                        + E * B * OUT * o_item),
    )

    return pl.pallas_call(
        kernel,
        out_shape=jax.ShapeDtypeStruct((E, B, OUT), out_dtype),
        grid_spec=pltpu.PrefetchScalarGridSpec(
            num_scalar_prefetch=0,
            grid=grid,
            in_specs=[
                pl.BlockSpec((e_tile, b_tile, in_tile), lambda e, b, j, k: (e, b, k)),
                pl.BlockSpec((e_tile, in_tile, out_tile), lambda e, b, j, k: (e, k, j)),
                pl.BlockSpec((e_tile, 1, out_tile), lambda e, b, j, k: (e, 0, j)),
            ],
            out_specs=pl.BlockSpec((e_tile, b_tile, out_tile),
                                   lambda e, b, j, k: (e, b, j)),
            scratch_shapes=scratch_shapes,
        ),
        compiler_params=pltpu.CompilerParams(
            dimension_semantics=("parallel", "parallel", "parallel", "arbitrary"),
            vmem_limit_bytes=vmem_limit,
        ),
        cost_estimate=cost,
    )(x, weight, bias)


# ---------------------------------------------------------------------------
# Parameter init (matches the PyTorch module as written)
# ---------------------------------------------------------------------------

def init_params(key, ensemble_size, in_features, out_features, dtype=jnp.float32):
    """Matches the PyTorch module's reset_parameters().

    The module stores weight slices as [in_features, out_features], so PyTorch's
    _calculate_fan_in_and_fan_out gives fan_in = tensor.size(1) = out_features.
    kaiming_normal_(a=sqrt(5)): gain = sqrt(2/(1+5)) = sqrt(1/3),
    std = gain / sqrt(fan_in).  bias ~ U(-1/sqrt(fan_in), 1/sqrt(fan_in)).
    """
    kw, kb = jax.random.split(key)
    fan_in = out_features
    std = math.sqrt(1.0 / 3.0) / math.sqrt(fan_in)
    weight = std * jax.random.normal(
        kw, (ensemble_size, in_features, out_features), dtype=dtype)
    bound = 1.0 / math.sqrt(fan_in)
    bias = jax.random.uniform(
        kb, (ensemble_size, 1, out_features), dtype=dtype,
        minval=-bound, maxval=bound)
    return weight, bias


# ---------------------------------------------------------------------------
# Tests
# ---------------------------------------------------------------------------

if __name__ == "__main__":
    fwd = jax.jit(ensembled_linear)

    # 1) Tiny regime from the droq module (E=4, B=8, IN=OUT=32): packed
    #    lane-dense path, (8, 128) output slab.
    ENSEMBLE, BATCH, IN_FEATURES, OUT_FEATURES = 4, 8, 32, 32
    kx, kp = jax.random.split(jax.random.PRNGKey(0))
    x = jax.random.normal(kx, (ENSEMBLE, BATCH, IN_FEATURES), dtype=jnp.float32)
    weight, bias = init_params(kp, ENSEMBLE, IN_FEATURES, OUT_FEATURES)
    out = jax.block_until_ready(fwd(x, weight, bias))
    ref = jnp.einsum("ebi,eio->ebo", x, weight) + bias
    assert out.shape == (ENSEMBLE, BATCH, OUT_FEATURES)
    assert jnp.allclose(out, ref, atol=1e-5, rtol=1e-5)

    # 2) General path, f32 direct accumulation, ensemble packing with >=2
    #    parallel grid steps (dual-TC friendly).
    E2, B2, IN2, OUT2 = 4, 8, 512, 384
    kx2, kp2 = jax.random.split(jax.random.PRNGKey(1))
    x2 = jax.random.normal(kx2, (E2, B2, IN2), dtype=jnp.float32)
    w2, b2 = init_params(kp2, E2, IN2, OUT2)
    out2 = jax.block_until_ready(fwd(x2, w2, b2))
    ref2 = jnp.einsum("ebi,eio->ebo", x2, w2) + b2
    assert jnp.allclose(out2, ref2, atol=1e-4, rtol=1e-4)

    # 3) General path with a tiled reduction axis (multiple k steps) and
    #    full-OUT (contiguous) weight tiles.
    E3, B3, IN3, OUT3 = 2, 16, 2048, 1536
    kx3, kp3 = jax.random.split(jax.random.PRNGKey(2))
    x3 = jax.random.normal(kx3, (E3, B3, IN3), dtype=jnp.float32)
    w3, b3 = init_params(kp3, E3, IN3, OUT3)
    out3 = jax.block_until_ready(fwd(x3, w3, b3))
    ref3 = jnp.einsum("ebi,eio->ebo", x3, w3) + b3
    assert jnp.allclose(out3, ref3, atol=1e-4, rtol=1e-4)

    # 4) Persistent-bf16 weights (halves weight-streaming HBM bytes); exercises
    #    the f32-scratch-accumulator kernel variant.
    E4, B4, IN4, OUT4 = 2, 16, 256, 256
    kx4, kp4 = jax.random.split(jax.random.PRNGKey(3))
    x4 = jax.random.normal(kx4, (E4, B4, IN4), dtype=jnp.float32).astype(jnp.bfloat16)
    w4, b4 = init_params(kp4, E4, IN4, OUT4)
    w4 = w4.astype(jnp.bfloat16)
    b4 = b4.astype(jnp.bfloat16)
    out4 = jax.block_until_ready(fwd(x4, w4, b4))
    ref4 = (jnp.einsum("ebi,eio->ebo", x4.astype(jnp.float32), w4.astype(jnp.float32))
            + b4.astype(jnp.float32))
    assert out4.dtype == jnp.bfloat16
    assert jnp.allclose(out4.astype(jnp.float32), ref4, atol=3e-2, rtol=3e-2)

    print("KERNEL_OK")
</pallas_src>

<mosaic_0001>
module attributes {stable_mosaic.version = 11 : i64} {
  func.func @_packed_kernel(%arg0: i32, %arg1: memref<4x8x32xf32, #tpu.memory_space<vmem>>, %arg2: memref<4x32x32xf32, #tpu.memory_space<vmem>>, %arg3: memref<4x1x32xf32, #tpu.memory_space<vmem>>, %arg4: memref<8x128xf32, #tpu.memory_space<vmem>>) attributes {dimension_semantics = [#tpu.dimension_semantics<arbitrary>], iteration_bounds = array<i64: 1>, scalar_prefetch = 0 : i64, scratch_operands = 0 : i64, tpu.core_type = #tpu.core_type<tc>, window_params = [{pipeline_mode = #tpu.pipeline_mode<synchronous>, transform_indices = @transform_0, window_bounds = array<i64: 4, 8, 32>}, {pipeline_mode = #tpu.pipeline_mode<synchronous>, transform_indices = @transform_1, window_bounds = array<i64: 4, 32, 32>}, {pipeline_mode = #tpu.pipeline_mode<synchronous>, transform_indices = @transform_2, window_bounds = array<i64: 4, 1, 32>}, {pipeline_mode = #tpu.pipeline_mode<synchronous>, transform_indices = @transform_3, window_bounds = array<i64: 8, 128>}]} {
    %c0 = arith.constant 0 : index
    %c0_0 = arith.constant 0 : index
    %c0_1 = arith.constant 0 : index
    %0 = vector.load %arg1[%c0, %c0_0, %c0_1] : memref<4x8x32xf32, #tpu.memory_space<vmem>>, vector<1x8x32xf32>
    %1 = vector.shape_cast %0 : vector<1x8x32xf32> to vector<8x32xf32>
    %c0_2 = arith.constant 0 : index
    %c0_3 = arith.constant 0 : index
    %c0_4 = arith.constant 0 : index
    %2 = vector.load %arg2[%c0_2, %c0_3, %c0_4] : memref<4x32x32xf32, #tpu.memory_space<vmem>>, vector<1x32x32xf32>
    %3 = vector.shape_cast %2 : vector<1x32x32xf32> to vector<32x32xf32>
    %cst = arith.constant dense<0.000000e+00> : vector<8x32xf32>
    %4 = tpu.matmul %1, %3, %cst {dimension_numbers = #tpu.dot_dimension_numbers<[1], [0], [0], [1], [0, 0, 1, 1], [], []>} : vector<8x32xf32>, vector<32x32xf32>, vector<8x32xf32> -> vector<8x32xf32>
    %c0_5 = arith.constant 0 : index
    %c0_6 = arith.constant 0 : index
    %c0_7 = arith.constant 0 : index
    %5 = vector.load %arg3[%c0_5, %c0_6, %c0_7] : memref<4x1x32xf32, #tpu.memory_space<vmem>>, vector<1x1x32xf32>
    %6 = vector.shape_cast %5 : vector<1x1x32xf32> to vector<1x32xf32>
    %7 = vector.broadcast %6 : vector<1x32xf32> to vector<8x32xf32>
    %8 = arith.addf %4, %7 : vector<8x32xf32>
    %c1 = arith.constant 1 : index
    %c0_8 = arith.constant 0 : index
    %c0_9 = arith.constant 0 : index
    %9 = vector.load %arg1[%c1, %c0_8, %c0_9] : memref<4x8x32xf32, #tpu.memory_space<vmem>>, vector<1x8x32xf32>
    %10 = vector.shape_cast %9 : vector<1x8x32xf32> to vector<8x32xf32>
    %c1_10 = arith.constant 1 : index
    %c0_11 = arith.constant 0 : index
    %c0_12 = arith.constant 0 : index
    %11 = vector.load %arg2[%c1_10, %c0_11, %c0_12] : memref<4x32x32xf32, #tpu.memory_space<vmem>>, vector<1x32x32xf32>
    %12 = vector.shape_cast %11 : vector<1x32x32xf32> to vector<32x32xf32>
    %cst_13 = arith.constant dense<0.000000e+00> : vector<8x32xf32>
    %13 = tpu.matmul %10, %12, %cst_13 {dimension_numbers = #tpu.dot_dimension_numbers<[1], [0], [0], [1], [0, 0, 1, 1], [], []>} : vector<8x32xf32>, vector<32x32xf32>, vector<8x32xf32> -> vector<8x32xf32>
    %c1_14 = arith.constant 1 : index
    %c0_15 = arith.constant 0 : index
    %c0_16 = arith.constant 0 : index
    %14 = vector.load %arg3[%c1_14, %c0_15, %c0_16] : memref<4x1x32xf32, #tpu.memory_space<vmem>>, vector<1x1x32xf32>
    %15 = vector.shape_cast %14 : vector<1x1x32xf32> to vector<1x32xf32>
    %16 = vector.broadcast %15 : vector<1x32xf32> to vector<8x32xf32>
    %17 = arith.addf %13, %16 : vector<8x32xf32>
    %c2 = arith.constant 2 : index
    %c0_17 = arith.constant 0 : index
    %c0_18 = arith.constant 0 : index
    %18 = vector.load %arg1[%c2, %c0_17, %c0_18] : memref<4x8x32xf32, #tpu.memory_space<vmem>>, vector<1x8x32xf32>
    %19 = vector.shape_cast %18 : vector<1x8x32xf32> to vector<8x32xf32>
    %c2_19 = arith.constant 2 : index
    %c0_20 = arith.constant 0 : index
    %c0_21 = arith.constant 0 : index
    %20 = vector.load %arg2[%c2_19, %c0_20, %c0_21] : memref<4x32x32xf32, #tpu.memory_space<vmem>>, vector<1x32x32xf32>
    %21 = vector.shape_cast %20 : vector<1x32x32xf32> to vector<32x32xf32>
    %cst_22 = arith.constant dense<0.000000e+00> : vector<8x32xf32>
    %22 = tpu.matmul %19, %21, %cst_22 {dimension_numbers = #tpu.dot_dimension_numbers<[1], [0], [0], [1], [0, 0, 1, 1], [], []>} : vector<8x32xf32>, vector<32x32xf32>, vector<8x32xf32> -> vector<8x32xf32>
    %c2_23 = arith.constant 2 : index
    %c0_24 = arith.constant 0 : index
    %c0_25 = arith.constant 0 : index
    %23 = vector.load %arg3[%c2_23, %c0_24, %c0_25] : memref<4x1x32xf32, #tpu.memory_space<vmem>>, vector<1x1x32xf32>
    %24 = vector.shape_cast %23 : vector<1x1x32xf32> to vector<1x32xf32>
    %25 = vector.broadcast %24 : vector<1x32xf32> to vector<8x32xf32>
    %26 = arith.addf %22, %25 : vector<8x32xf32>
    %c3 = arith.constant 3 : index
    %c0_26 = arith.constant 0 : index
    %c0_27 = arith.constant 0 : index
    %27 = vector.load %arg1[%c3, %c0_26, %c0_27] : memref<4x8x32xf32, #tpu.memory_space<vmem>>, vector<1x8x32xf32>
    %28 = vector.shape_cast %27 : vector<1x8x32xf32> to vector<8x32xf32>
    %c3_28 = arith.constant 3 : index
    %c0_29 = arith.constant 0 : index
    %c0_30 = arith.constant 0 : index
    %29 = vector.load %arg2[%c3_28, %c0_29, %c0_30] : memref<4x32x32xf32, #tpu.memory_space<vmem>>, vector<1x32x32xf32>
    %30 = vector.shape_cast %29 : vector<1x32x32xf32> to vector<32x32xf32>
    %cst_31 = arith.constant dense<0.000000e+00> : vector<8x32xf32>
    %31 = tpu.matmul %28, %30, %cst_31 {dimension_numbers = #tpu.dot_dimension_numbers<[1], [0], [0], [1], [0, 0, 1, 1], [], []>} : vector<8x32xf32>, vector<32x32xf32>, vector<8x32xf32> -> vector<8x32xf32>
    %c3_32 = arith.constant 3 : index
    %c0_33 = arith.constant 0 : index
    %c0_34 = arith.constant 0 : index
    %32 = vector.load %arg3[%c3_32, %c0_33, %c0_34] : memref<4x1x32xf32, #tpu.memory_space<vmem>>, vector<1x1x32xf32>
    %33 = vector.shape_cast %32 : vector<1x1x32xf32> to vector<1x32xf32>
    %34 = vector.broadcast %33 : vector<1x32xf32> to vector<8x32xf32>
    %35 = arith.addf %31, %34 : vector<8x32xf32>
    %36 = tpu.concatenate %8, %17, %26, %35 in 1 : vector<8x32xf32>, vector<8x32xf32>, vector<8x32xf32>, vector<8x32xf32> -> vector<8x128xf32>
    %c0_35 = arith.constant 0 : index
    %c0_36 = arith.constant 0 : index
    %37 = vector.load %arg4[%c0_35, %c0_36] : memref<8x128xf32, #tpu.memory_space<vmem>>, vector<8x128xf32>
    tpu.vector_store %arg4[%c0_35, %c0_36], %36 {strides = array<i32>} : memref<8x128xf32, #tpu.memory_space<vmem>>, vector<8x128xf32>,
    return
  }
  func.func @transform_0(%arg0: i32) -> (i32, i32, i32) {
    %c0_i32 = arith.constant 0 : i32
    %c0_i32_0 = arith.constant 0 : i32
    %c0_i32_1 = arith.constant 0 : i32
    %c0_i32_2 = arith.constant 0 : i32
    return %c0_i32, %c0_i32_0, %c0_i32_1 : i32, i32, i32
  }
  func.func @transform_1(%arg0: i32) -> (i32, i32, i32) {
    %c0_i32 = arith.constant 0 : i32
    %c0_i32_0 = arith.constant 0 : i32
    %c0_i32_1 = arith.constant 0 : i32
    %c0_i32_2 = arith.constant 0 : i32
    return %c0_i32, %c0_i32_0, %c0_i32_1 : i32, i32, i32
  }
  func.func @transform_2(%arg0: i32) -> (i32, i32, i32) {
    %c0_i32 = arith.constant 0 : i32
    %c0_i32_0 = arith.constant 0 : i32
    %c0_i32_1 = arith.constant 0 : i32
    %c0_i32_2 = arith.constant 0 : i32
    return %c0_i32, %c0_i32_0, %c0_i32_1 : i32, i32, i32
  }
  func.func @transform_3(%arg0: i32) -> (i32, i32) {
    %c0_i32 = arith.constant 0 : i32
    %c0_i32_0 = arith.constant 0 : i32
    %c0_i32_1 = arith.constant 0 : i32
    return %c0_i32, %c0_i32_0 : i32, i32
  }
}

</mosaic_0001>

<llo_original>
// kernel: ensembled_linear.1
$region0: #{ensembled_linear.1}
  #allocation0 [shape = 'u32[]', space=smem, size = 0x4, offset = 0x4, fixed_abs, tag = 'smem constant byte address 0x4 - core index']
  #allocation1 [shape = 'u32[144,128]{1,0:T(1,128)}', space=vmem, size = 0x12000, scoped, tag = 'internal scratch']
  %s0 = inlined_call_operand.hbm [shape: f32[4,8,32], index: 0, kind: input, shape index: {}]
  %s1 = inlined_call_operand.hbm [shape: f32[4,32,32], index: 1, kind: input, shape index: {}]
  %s2 = inlined_call_operand.vmem [shape: f32[4,1,32], index: 2, kind: input, shape index: {}]
  %s3 = inlined_call_operand.vmem [shape: f32[8,128], index: 3, kind: output, shape index: {}]
  %s4 = sld [smem:[#allocation0]]
  $region30: #{ensembled_linear.1} parent=0
    _
  %s6 = ssub.s32 1, %s4
  %s7 = scalar_select 0, %s6, %s4
  $region1: #{ensembled_linear.1} parent=0
    #allocation2 [shape = 'u8[16384]{0}', space=vmem, size = 0x4000, scoped, tag = 'input window, operand 0, single buffered']
    #allocation3 [shape = 's32[1]{0}', space=sflag, size = 0x4, scoped, tag = 'scoped memory for ensembled_linear.1']
    #allocation4 [shape = 'u8[65536]{0}', space=vmem, size = 0x10000, scoped, tag = 'input window, operand 1, single buffered']
    #allocation5 [shape = 's32[1]{0}', space=sflag, size = 0x4, scoped, tag = 'scoped memory for ensembled_linear.1']
    %8 = vsyncpa [#allocation3], 0
    %9 = vsyncpa [#allocation5], 0
    // Predicated region
    $region2: #{ensembled_linear.1} parent=1 // pred_check
      _
    $region3: #{ensembled_linear.1} parent=1 // pred_check_branch
      %11 = sbr.rel (0) target = $region5
    $region4: #{ensembled_linear.1} parent=1 // pred_region
      %s13 = ssub.s32 512, 512
      %14 = vsyncadd [#allocation3], %s13
      %s15 = sshll.u32 [#allocation2], 4
      %s16 = int_to_ptr.vmem [resolvable:$true] %s15
      %21 = dma.hbm_to_vmem [thread:$0]  %s0, 512, %s16, [#allocation3], 128, 128, 8
    $region5: #{ensembled_linear.1} parent=1 // pred_fallthru
      _
    // Predicated region
    $region6: #{ensembled_linear.1} parent=1 // pred_check
      _
    $region7: #{ensembled_linear.1} parent=1 // pred_check_branch
      %23 = sbr.rel (0) target = $region9
    $region8: #{ensembled_linear.1} parent=1 // pred_region
      %s25 = ssub.s32 2048, 2048
      %26 = vsyncadd [#allocation5], %s25
      %s27 = sshll.u32 [#allocation4], 4
      %s28 = int_to_ptr.vmem [resolvable:$true] %s27
      %33 = dma.hbm_to_vmem [thread:$0]  %s1, 2048, %s28, [#allocation5], 128, 128, 8
    $region9: #{ensembled_linear.1} parent=1 // pred_fallthru
      _
    // Predicated region
    $region10: #{ensembled_linear.1} parent=1 // pred_check
      _
    $region11: #{ensembled_linear.1} parent=1 // pred_check_branch
      %35 = sbr.rel (0) target = $region13
    $region12: #{ensembled_linear.1} parent=1 // pred_region
      _
    $region13: #{ensembled_linear.1} parent=1 // pred_fallthru
      _
    // Predicated region
    $region14: #{ensembled_linear.1} parent=1 // pred_check
      _
    $region15: #{ensembled_linear.1} parent=1 // pred_check_branch
      %37 = sbr.rel (0) target = $region17
    $region16: #{ensembled_linear.1} parent=1 // pred_region
      %38 = dma.done [#allocation3], 512
    $region17: #{ensembled_linear.1} parent=1 // pred_fallthru
      _
    // Predicated region
    $region18: #{ensembled_linear.1} parent=1 // pred_check
      _
    $region19: #{ensembled_linear.1} parent=1 // pred_check_branch
      %40 = sbr.rel (0) target = $region21
    $region20: #{ensembled_linear.1} parent=1 // pred_region
      %41 = dma.done [#allocation5], 2048
    $region21: #{ensembled_linear.1} parent=1 // pred_fallthru
      _
    %v42 = vld [vmem:[#allocation2] sm:$0xff]
    %v43 = vld [vmem:[#allocation4] sm:$0xff]
    %v44 = vld [vmem:[#allocation4 + $0x8] sm:$0xff]
    %v45 = vld [vmem:[#allocation4 + $0x10] sm:$0xff]
    %v46 = vld [vmem:[#allocation4 + $0x18] sm:$0xff]
    %v47 = vld [vmem:[%s2] sm:$0x1]
    %v49 = vlaneseq
    %v50 = vshrl.u32 %v49, 7
    %v51 = vsub.s32 0, %v50
    %v52 = vrot.slane %v47, %v51
    %vm54 = vcmask 261120
    %v56 = vsel %vm54, %v42, 0
    %58 = vmatprep.subr.mxu0 0.0
    %59 = vmatpush1.msra.mxu0 %v43
    %60 = vmatprep.subr.mxu0 0.0
    %61 = vmatpush1.msra.mxu0 %v44
    %62 = vmatprep.subr.mxu0 0.0
    %63 = vmatpush1.msra.mxu0 %v45
    %64 = vmatprep.subr.mxu0 0.0
    %65 = vmatpush1.msra.mxu0 %v46
    %66 = vmatprep.subr.mxu0 0.0
    %67 = vmatpush1.msra.mxu0 0.0
    %68 = vmatprep.subr.mxu0 0.0
    %69 = vmatpush1.msra.mxu0 0.0
    %70 = vmatprep.subr.mxu0 0.0
    %71 = vmatpush1.msra.mxu0 0.0
    %72 = vmatprep.subr.mxu0 0.0
    %73 = vmatpush1.msra.mxu0 0.0
    %74 = vmatprep.subr.mxu0 0.0
    %75 = vmatpush1.msra.mxu0 0.0
    %76 = vmatprep.subr.mxu0 0.0
    %77 = vmatpush1.msra.mxu0 0.0
    %78 = vmatprep.subr.mxu0 0.0
    %79 = vmatpush1.msra.mxu0 0.0
    %80 = vmatprep.subr.mxu0 0.0
    %81 = vmatpush1.msra.mxu0 0.0
    %82 = vmatprep.subr.mxu0 0.0
    %83 = vmatpush1.msra.mxu0 0.0
    %84 = vmatprep.subr.mxu0 0.0
    %85 = vmatpush1.msra.mxu0 0.0
    %86 = vmatprep.subr.mxu0 0.0
    %87 = vmatpush1.msra.mxu0 0.0
    %88 = vmatprep.subr.mxu0 0.0
    %89 = vmatpush1.msra.mxu0 0.0
    %90 = vmatprep.subr.mxu0 0.0
    %91 = vmatpush1.msra.mxu0 0.0
    %92 = vmatprep.subr.mxu0 0.0
    %93 = vmatpush1.msra.mxu0 0.0
    %94 = vmatprep.subr.mxu0 0.0
    %95 = vmatpush1.msra.mxu0 0.0
    %96 = vmatprep.subr.mxu0 0.0
    %97 = vmatpush1.msra.mxu0 0.0
    %98 = vmatprep.subr.mxu0 0.0
    %99 = vmatpush1.msra.mxu0 0.0
    %100 = vmatprep.subr.mxu0 0.0
    %101 = vmatpush1.msra.mxu0 0.0
    %102 = vmatprep.subr.mxu0 0.0
    %103 = vmatpush1.msra.mxu0 0.0
    %104 = vmatprep.subr.mxu0 0.0
    %105 = vmatpush1.msra.mxu0 0.0
    %106 = vmatprep.subr.mxu0 0.0
    %107 = vmatpush1.msra.mxu0 0.0
    %108 = vmatprep.subr.mxu0 0.0
    %109 = vmatpush1.msra.mxu0 0.0
    %110 = vmatprep.subr.mxu0 0.0
    %111 = vmatpush1.msra.mxu0 0.0
    %112 = vmatprep.subr.mxu0 0.0
    %113 = vmatpush1.msra.mxu0 0.0
    %114 = vmatprep.subr.mxu0 0.0
    %115 = vmatpush1.msra.mxu0 0.0
    %116 = vmatprep.subr.mxu0 0.0
    %117 = vmatpush1.msra.mxu0 0.0
    %118 = vmatprep.subr.mxu0 0.0
    %119 = vmatpush1.msra.mxu0 0.0
    %120 = vmatprep.subr.mxu0 0.0
    %121 = vmatpush1.msra.mxu0 0.0
    %122 = vmatprep.mubr.f32.mxu0 0.0
    %123 = vmatmul.mubr.f32.gmra.mrb[0].mxu0 %v56
    %v124 = vpop.f32.mrb[0].mxu0
    %v125 = vadd.f32 %v52, %v124
    %v126 = vpop.f32.mrb[0].mxu0
    %127 = vdwg.mxu0
    %s128 = scalar_lea.vmem [#allocation2], 8
    %v129 = vld [vmem:[%s128] sm:$0xff]
    %s130 = scalar_lea.vmem [#allocation4], 32
    %v131 = vld [vmem:[%s130] sm:$0xff]
    %v132 = vld [vmem:[%s130 + $0x8] sm:$0xff]
    %v133 = vld [vmem:[%s130 + $0x10] sm:$0xff]
    %v134 = vld [vmem:[%s130 + $0x18] sm:$0xff]
    %s135 = scalar_lea.vmem %s2, 1
    %v136 = vld [vmem:[%s135] sm:$0x1]
    %v138 = vlaneseq
    %v139 = vshrl.u32 %v138, 7
    %v140 = vsub.s32 0, %v139
    %v141 = vrot.slane %v136, %v140
    %v144 = vsel %vm54, %v129, 0
    %146 = vmatprep.subr.mxu0 0.0
    %147 = vmatpush1.msra.mxu0 %v131
    %148 = vmatprep.subr.mxu0 0.0
    %149 = vmatpush1.msra.mxu0 %v132
    %150 = vmatprep.subr.mxu0 0.0
    %151 = vmatpush1.msra.mxu0 %v133
    %152 = vmatprep.subr.mxu0 0.0
    %153 = vmatpush1.msra.mxu0 %v134
    %154 = vmatprep.subr.mxu0 0.0
    %155 = vmatpush1.msra.mxu0 0.0
    %156 = vmatprep.subr.mxu0 0.0
    %157 = vmatpush1.msra.mxu0 0.0
    %158 = vmatprep.subr.mxu0 0.0
    %159 = vmatpush1.msra.mxu0 0.0
    %160 = vmatprep.subr.mxu0 0.0
    %161 = vmatpush1.msra.mxu0 0.0
    %162 = vmatprep.subr.mxu0 0.0
    %163 = vmatpush1.msra.mxu0 0.0
    %164 = vmatprep.subr.mxu0 0.0
    %165 = vmatpush1.msra.mxu0 0.0
    %166 = vmatprep.subr.mxu0 0.0
    %167 = vmatpush1.msra.mxu0 0.0
    %168 = vmatprep.subr.mxu0 0.0
    %169 = vmatpush1.msra.mxu0 0.0
    %170 = vmatprep.subr.mxu0 0.0
    %171 = vmatpush1.msra.mxu0 0.0
    %172 = vmatprep.subr.mxu0 0.0
    %173 = vmatpush1.msra.mxu0 0.0
    %174 = vmatprep.subr.mxu0 0.0
    %175 = vmatpush1.msra.mxu0 0.0
    %176 = vmatprep.subr.mxu0 0.0
    %177 = vmatpush1.msra.mxu0 0.0
    %178 = vmatprep.subr.mxu0 0.0
    %179 = vmatpush1.msra.mxu0 0.0
    %180 = vmatprep.subr.mxu0 0.0
    %181 = vmatpush1.msra.mxu0 0.0
    %182 = vmatprep.subr.mxu0 0.0
    %183 = vmatpush1.msra.mxu0 0.0
    %184 = vmatprep.subr.mxu0 0.0
    %185 = vmatpush1.msra.mxu0 0.0
    %186 = vmatprep.subr.mxu0 0.0
    %187 = vmatpush1.msra.mxu0 0.0
    %188 = vmatprep.subr.mxu0 0.0
    %189 = vmatpush1.msra.mxu0 0.0
    %190 = vmatprep.subr.mxu0 0.0
    %191 = vmatpush1.msra.mxu0 0.0
    %192 = vmatprep.subr.mxu0 0.0
    %193 = vmatpush1.msra.mxu0 0.0
    %194 = vmatprep.subr.mxu0 0.0
    %195 = vmatpush1.msra.mxu0 0.0
    %196 = vmatprep.subr.mxu0 0.0
    %197 = vmatpush1.msra.mxu0 0.0
    %198 = vmatprep.subr.mxu0 0.0
    %199 = vmatpush1.msra.mxu0 0.0
    %200 = vmatprep.subr.mxu0 0.0
    %201 = vmatpush1.msra.mxu0 0.0
    %202 = vmatprep.subr.mxu0 0.0
    %203 = vmatpush1.msra.mxu0 0.0
    %204 = vmatprep.subr.mxu0 0.0
    %205 = vmatpush1.msra.mxu0 0.0
    %206 = vmatprep.subr.mxu0 0.0
    %207 = vmatpush1.msra.mxu0 0.0
    %208 = vmatprep.subr.mxu0 0.0
    %209 = vmatpush1.msra.mxu0 0.0
    %210 = vmatprep.mubr.f32.mxu0 0.0
    %211 = vmatmul.mubr.f32.gmra.mrb[0].mxu0 %v144
    %v212 = vpop.f32.mrb[0].mxu0
    %v213 = vadd.f32 %v141, %v212
    %v214 = vpop.f32.mrb[0].mxu0
    %215 = vdwg.mxu0
    %s216 = scalar_lea.vmem [#allocation2], 16
    %v217 = vld [vmem:[%s216] sm:$0xff]
    %s218 = scalar_lea.vmem [#allocation4], 64
    %v219 = vld [vmem:[%s218] sm:$0xff]
    %v220 = vld [vmem:[%s218 + $0x8] sm:$0xff]
    %v221 = vld [vmem:[%s218 + $0x10] sm:$0xff]
    %v222 = vld [vmem:[%s218 + $0x18] sm:$0xff]
    %s223 = scalar_lea.vmem %s2, 2
    %v224 = vld [vmem:[%s223] sm:$0x1]
    %v226 = vlaneseq
    %v227 = vshrl.u32 %v226, 7
    %v228 = vsub.s32 0, %v227
    %v229 = vrot.slane %v224, %v228
    %v232 = vsel %vm54, %v217, 0
    %234 = vmatprep.subr.mxu0 0.0
    %235 = vmatpush1.msra.mxu0 %v219
    %236 = vmatprep.subr.mxu0 0.0
    %237 = vmatpush1.msra.mxu0 %v220
    %238 = vmatprep.subr.mxu0 0.0
    %239 = vmatpush1.msra.mxu0 %v221
    %240 = vmatprep.subr.mxu0 0.0
    %241 = vmatpush1.msra.mxu0 %v222
    %242 = vmatprep.subr.mxu0 0.0
    %243 = vmatpush1.msra.mxu0 0.0
    %244 = vmatprep.subr.mxu0 0.0
    %245 = vmatpush1.msra.mxu0 0.0
    %246 = vmatprep.subr.mxu0 0.0
    %247 = vmatpush1.msra.mxu0 0.0
    %248 = vmatprep.subr.mxu0 0.0
    %249 = vmatpush1.msra.mxu0 0.0
    %250 = vmatprep.subr.mxu0 0.0
    %251 = vmatpush1.msra.mxu0 0.0
    %252 = vmatprep.subr.mxu0 0.0
    %253 = vmatpush1.msra.mxu0 0.0
    %254 = vmatprep.subr.mxu0 0.0
    %255 = vmatpush1.msra.mxu0 0.0
    %256 = vmatprep.subr.mxu0 0.0
    %257 = vmatpush1.msra.mxu0 0.0
    %258 = vmatprep.subr.mxu0 0.0
    %259 = vmatpush1.msra.mxu0 0.0
    %260 = vmatprep.subr.mxu0 0.0
    %261 = vmatpush1.msra.mxu0 0.0
    %262 = vmatprep.subr.mxu0 0.0
    %263 = vmatpush1.msra.mxu0 0.0
    %264 = vmatprep.subr.mxu0 0.0
    %265 = vmatpush1.msra.mxu0 0.0
    %266 = vmatprep.subr.mxu0 0.0
    %267 = vmatpush1.msra.mxu0 0.0
    %268 = vmatprep.subr.mxu0 0.0
    %269 = vmatpush1.msra.mxu0 0.0
    %270 = vmatprep.subr.mxu0 0.0
    %271 = vmatpush1.msra.mxu0 0.0
    %272 = vmatprep.subr.mxu0 0.0
    %273 = vmatpush1.msra.mxu0 0.0
    %274 = vmatprep.subr.mxu0 0.0
    %275 = vmatpush1.msra.mxu0 0.0
    %276 = vmatprep.subr.mxu0 0.0
    %277 = vmatpush1.msra.mxu0 0.0
    %278 = vmatprep.subr.mxu0 0.0
    %279 = vmatpush1.msra.mxu0 0.0
    %280 = vmatprep.subr.mxu0 0.0
    %281 = vmatpush1.msra.mxu0 0.0
    %282 = vmatprep.subr.mxu0 0.0
    %283 = vmatpush1.msra.mxu0 0.0
    %284 = vmatprep.subr.mxu0 0.0
    %285 = vmatpush1.msra.mxu0 0.0
    %286 = vmatprep.subr.mxu0 0.0
    %287 = vmatpush1.msra.mxu0 0.0
    %288 = vmatprep.subr.mxu0 0.0
    %289 = vmatpush1.msra.mxu0 0.0
    %290 = vmatprep.subr.mxu0 0.0
    %291 = vmatpush1.msra.mxu0 0.0
    %292 = vmatprep.subr.mxu0 0.0
    %293 = vmatpush1.msra.mxu0 0.0
    %294 = vmatprep.subr.mxu0 0.0
    %295 = vmatpush1.msra.mxu0 0.0
    %296 = vmatprep.subr.mxu0 0.0
    %297 = vmatpush1.msra.mxu0 0.0
    %298 = vmatprep.mubr.f32.mxu0 0.0
    %299 = vmatmul.mubr.f32.gmra.mrb[0].mxu0 %v232
    %v300 = vpop.f32.mrb[0].mxu0
    %v301 = vadd.f32 %v229, %v300
    %v302 = vpop.f32.mrb[0].mxu0
    %303 = vdwg.mxu0
    %s304 = scalar_lea.vmem [#allocation2], 24
    %v305 = vld [vmem:[%s304] sm:$0xff]
    %s306 = scalar_lea.vmem [#allocation4], 96
    %v307 = vld [vmem:[%s306] sm:$0xff]
    %v308 = vld [vmem:[%s306 + $0x8] sm:$0xff]
    %v309 = vld [vmem:[%s306 + $0x10] sm:$0xff]
    %v310 = vld [vmem:[%s306 + $0x18] sm:$0xff]
    %s311 = scalar_lea.vmem %s2, 3
    %v312 = vld [vmem:[%s311] sm:$0x1]
    %v314 = vlaneseq
    %v315 = vshrl.u32 %v314, 7
    %v316 = vsub.s32 0, %v315
    %v317 = vrot.slane %v312, %v316
    %v320 = vsel %vm54, %v305, 0
    %322 = vmatprep.subr.mxu0 0.0
    %323 = vmatpush1.msra.mxu0 %v307
    %324 = vmatprep.subr.mxu0 0.0
    %325 = vmatpush1.msra.mxu0 %v308
    %326 = vmatprep.subr.mxu0 0.0
    %327 = vmatpush1.msra.mxu0 %v309
    %328 = vmatprep.subr.mxu0 0.0
    %329 = vmatpush1.msra.mxu0 %v310
    %330 = vmatprep.subr.mxu0 0.0
    %331 = vmatpush1.msra.mxu0 0.0
    %332 = vmatprep.subr.mxu0 0.0
    %333 = vmatpush1.msra.mxu0 0.0
    %334 = vmatprep.subr.mxu0 0.0
    %335 = vmatpush1.msra.mxu0 0.0
    %336 = vmatprep.subr.mxu0 0.0
    %337 = vmatpush1.msra.mxu0 0.0
    %338 = vmatprep.subr.mxu0 0.0
    %339 = vmatpush1.msra.mxu0 0.0
    %340 = vmatprep.subr.mxu0 0.0
    %341 = vmatpush1.msra.mxu0 0.0
    %342 = vmatprep.subr.mxu0 0.0
    %343 = vmatpush1.msra.mxu0 0.0
    %344 = vmatprep.subr.mxu0 0.0
    %345 = vmatpush1.msra.mxu0 0.0
    %346 = vmatprep.subr.mxu0 0.0
    %347 = vmatpush1.msra.mxu0 0.0
    %348 = vmatprep.subr.mxu0 0.0
    %349 = vmatpush1.msra.mxu0 0.0
    %350 = vmatprep.subr.mxu0 0.0
    %351 = vmatpush1.msra.mxu0 0.0
    %352 = vmatprep.subr.mxu0 0.0
    %353 = vmatpush1.msra.mxu0 0.0
    %354 = vmatprep.subr.mxu0 0.0
    %355 = vmatpush1.msra.mxu0 0.0
    %356 = vmatprep.subr.mxu0 0.0
    %357 = vmatpush1.msra.mxu0 0.0
    %358 = vmatprep.subr.mxu0 0.0
    %359 = vmatpush1.msra.mxu0 0.0
    %360 = vmatprep.subr.mxu0 0.0
    %361 = vmatpush1.msra.mxu0 0.0
    %362 = vmatprep.subr.mxu0 0.0
    %363 = vmatpush1.msra.mxu0 0.0
    %364 = vmatprep.subr.mxu0 0.0
    %365 = vmatpush1.msra.mxu0 0.0
    %366 = vmatprep.subr.mxu0 0.0
    %367 = vmatpush1.msra.mxu0 0.0
    %368 = vmatprep.subr.mxu0 0.0
    %369 = vmatpush1.msra.mxu0 0.0
    %370 = vmatprep.subr.mxu0 0.0
    %371 = vmatpush1.msra.mxu0 0.0
    %372 = vmatprep.subr.mxu0 0.0
    %373 = vmatpush1.msra.mxu0 0.0
    %374 = vmatprep.subr.mxu0 0.0
    %375 = vmatpush1.msra.mxu0 0.0
    %376 = vmatprep.subr.mxu0 0.0
    %377 = vmatpush1.msra.mxu0 0.0
    %378 = vmatprep.subr.mxu0 0.0
    %379 = vmatpush1.msra.mxu0 0.0
    %380 = vmatprep.subr.mxu0 0.0
    %381 = vmatpush1.msra.mxu0 0.0
    %382 = vmatprep.subr.mxu0 0.0
    %383 = vmatpush1.msra.mxu0 0.0
    %384 = vmatprep.subr.mxu0 0.0
    %385 = vmatpush1.msra.mxu0 0.0
    %386 = vmatprep.mubr.f32.mxu0 0.0
    %387 = vmatmul.mubr.f32.gmra.mrb[0].mxu0 %v320
    %v388 = vpop.f32.mrb[0].mxu0
    %v389 = vadd.f32 %v317, %v388
    %v390 = vpop.f32.mrb[0].mxu0
    %391 = vdwg.mxu0
    %393 = vrot.lane.b32.xlu0 %v213, 32
    %v394 = vpop.permute.xlu0 %393
    %397 = vrot.lane.b32.xlu0 %v301, 64
    %v398 = vpop.permute.xlu0 %397
    %401 = vrot.lane.b32.xlu0 %v389, 96
    %v402 = vpop.permute.xlu0 %401
    %v404 = vsel %vm54, %v125, %v394
    %vm405 = vcmask 523264
    %v406 = vsel %vm405, %v404, %v398
    %vm407 = vcmask 785408
    %v408 = vsel %vm407, %v406, %v402
    %409 = vst [vmem:[%s3] sm:$0xff] %v408
    // Predicated region
    $region22: #{ensembled_linear.1} parent=1 // pred_check
      _
    $region23: #{ensembled_linear.1} parent=1 // pred_check_branch
      %411 = sbr.rel (0) target = $region25
    $region24: #{ensembled_linear.1} parent=1 // pred_region
      _
    $region25: #{ensembled_linear.1} parent=1 // pred_fallthru
      _
    // Predicated region
    $region26: #{ensembled_linear.1} parent=1 // pred_check
      _
    $region27: #{ensembled_linear.1} parent=1 // pred_check_branch
      %413 = sbr.rel (0) target = $region29
    $region28: #{ensembled_linear.1} parent=1 // pred_region
      _
    $region29: #{ensembled_linear.1} parent=1 // pred_fallthru
      _
    %414 = vsyncpa [#allocation3], 1
    %415 = vsyncpa [#allocation5], 1

</llo_original>
